<compile_context>
chip_gen: v7x
topology: tpu7x:2x2x1
jax: 0.10.0
libtpu: 0.0.40
codegen_flags: <defaults>
</compile_context>

<pallas_src>
import functools

import jax
import jax.numpy as jnp
from jax.experimental import pallas as pl
from jax.experimental.pallas import tpu as pltpu

H1 = 93
H2 = 90
OUTPUT_DIM = 1


def _round_up(n, m):
    return ((n + m - 1) // m) * m


def _regression_kernel(x_ref, w1_ref, b1_ref, w2_ref, b2_ref, w3_ref, b3_ref, o_ref):
    # x tile: (TB, D) bf16 ; w1/w2 bf16 ; biases & w3 f32 ; output tile: (1, TB) f32
    x = x_ref[...]

    # layer 1: Linear(D, H1) + ReLU   (bf16 MXU inputs, f32 accumulation)
    h1 = jnp.dot(x, w1_ref[...], preferred_element_type=jnp.float32) + b1_ref[...]
    h1 = jnp.maximum(h1, 0.0).astype(jnp.bfloat16)

    # layer 2: Linear(H1, H2) + ReLU
    h2 = jnp.dot(h1, w2_ref[...], preferred_element_type=jnp.float32) + b2_ref[...]
    h2 = jnp.maximum(h2, 0.0)

    # output layer: Linear(H2, 1). An N=1 matmul wastes an MXU push for one useful
    # column; use the otherwise-idle VPU/XLU: multiply by the w3 row and lane-reduce.
    out = jnp.sum(h2 * w3_ref[...], axis=-1)                 # (TB,) f32
    # lane-dense store: one (1, TB) row instead of a masked (TB, 1) column
    o_ref[...] = (out[None, :] + b3_ref[...]).astype(o_ref.dtype)


@functools.partial(jax.jit, static_argnames=("tile_batch",))
def regression_forward(x, params, *, tile_batch=512):
    """x: (B, INPUT_DIM) float32. params: dict of w1,b1,w2,b2,w3,b3 (weights (in,out))."""
    B, D = x.shape

    # bf16 matmul operands; keep biases / final reduce weights in f32.
    w1 = params["w1"].astype(jnp.bfloat16)
    w2 = params["w2"].astype(jnp.bfloat16)
    w3 = params["w3"].reshape(1, H2).astype(jnp.float32)   # row vector for VPU reduce
    b1 = params["b1"].astype(jnp.float32)
    b2 = params["b2"].astype(jnp.float32)
    b3 = params["b3"].reshape(1, 1).astype(jnp.float32)

    # Batch tiling: big 128-aligned tiles when B is large; pad B up to a tile multiple.
    tb = min(tile_batch, _round_up(B, 8))
    b_pad = _round_up(B, tb)
    xb = x.astype(jnp.bfloat16)
    if b_pad != B:
        xb = jnp.pad(xb, ((0, b_pad - B), (0, 0)))

    grid = (b_pad // tb,)

    flops = 2 * b_pad * (D * H1 + H1 * H2 + H2)
    bytes_accessed = (
        b_pad * D * 2                      # x (bf16)
        + (D * H1 + H1 * H2) * 2           # w1, w2 (bf16)
        + (H1 + H2 + H2 + 1) * 4           # b1, b2, w3, b3 (f32)
        + b_pad * 4                        # output (f32)
    )

    out_row = pl.pallas_call(
        _regression_kernel,
        out_shape=jax.ShapeDtypeStruct((1, b_pad), jnp.float32),
        grid=grid,
        in_specs=[
            pl.BlockSpec((tb, D), lambda i: (i, 0)),      # x: tiled over batch, pipelined
            pl.BlockSpec(w1.shape, lambda i: (0, 0)),     # weights/biases: VMEM-resident
            pl.BlockSpec(b1.shape, lambda i: (0, 0)),
            pl.BlockSpec(w2.shape, lambda i: (0, 0)),
            pl.BlockSpec(b2.shape, lambda i: (0, 0)),
            pl.BlockSpec(w3.shape, lambda i: (0, 0)),
            pl.BlockSpec(b3.shape, lambda i: (0, 0)),
        ],
        out_specs=pl.BlockSpec((1, tb), lambda i: (0, i)),  # lane-dense output row
        compiler_params=pltpu.CompilerParams(
            dimension_semantics=("parallel",),
            vmem_limit_bytes=64 << 20,
        ),
        cost_estimate=pl.CostEstimate(
            flops=flops, transcendentals=0, bytes_accessed=bytes_accessed
        ),
    )(xb, w1, b1, w2, b2, w3, b3)

    # (1, b_pad) lane-dense row -> (B, 1) column as the PyTorch module returns.
    return out_row.reshape(-1)[:B].reshape(B, OUTPUT_DIM)


def init_params(key, input_dim):
    """Deterministic init matching nn.Linear shapes (weights stored as (in, out))."""
    ks = jax.random.split(key, 6)

    def linear(kw, kb, fan_in, fan_out):
        # PyTorch-style uniform(-1/sqrt(fan_in), 1/sqrt(fan_in))
        bound = 1.0 / jnp.sqrt(jnp.float32(fan_in))
        w = jax.random.uniform(kw, (fan_in, fan_out), jnp.float32, -bound, bound)
        b = jax.random.uniform(kb, (1, fan_out), jnp.float32, -bound, bound)
        return w, b

    w1, b1 = linear(ks[0], ks[1], input_dim, H1)
    w2, b2 = linear(ks[2], ks[3], H1, H2)
    w3, b3 = linear(ks[4], ks[5], H2, OUTPUT_DIM)
    return {"w1": w1, "b1": b1, "w2": w2, "b2": b2, "w3": w3, "b3": b3}


if __name__ == "__main__":
    key = jax.random.PRNGKey(0)
    k_x, k_p = jax.random.split(key)

    BATCH = 8
    INPUT_DIM = 32  # X_train.shape[1] stand-in (synthetic)

    x = jax.random.normal(k_x, (BATCH, INPUT_DIM), jnp.float32)
    params = init_params(k_p, INPUT_DIM)

    out = regression_forward(x, params)
    out = jax.block_until_ready(out)

    # Pure-JAX f32 reference (kernel uses bf16 matmul operands -> loosened tolerance).
    ref = jnp.maximum(x @ params["w1"] + params["b1"], 0.0)
    ref = jnp.maximum(ref @ params["w2"] + params["b2"], 0.0)
    ref = ref @ params["w3"] + params["b3"]

    assert out.shape == (BATCH, OUTPUT_DIM)
    assert jnp.allclose(out, ref, atol=3e-2, rtol=3e-2), (
        f"max abs diff {jnp.max(jnp.abs(out - ref))}"
    )

    print("KERNEL_OK")
</pallas_src>

<mosaic_0001>
module attributes {stable_mosaic.version = 11 : i64} {
  func.func @_regression_kernel(%arg0: i32, %arg1: memref<8x32xbf16, #tpu.memory_space<vmem>>, %arg2: memref<32x93xbf16, #tpu.memory_space<vmem>>, %arg3: memref<1x93xf32, #tpu.memory_space<vmem>>, %arg4: memref<93x90xbf16, #tpu.memory_space<vmem>>, %arg5: memref<1x90xf32, #tpu.memory_space<vmem>>, %arg6: memref<1x90xf32, #tpu.memory_space<vmem>>, %arg7: memref<1x1xf32, #tpu.memory_space<vmem>>, %arg8: memref<1x8xf32, #tpu.memory_space<vmem>>) attributes {dimension_semantics = [#tpu.dimension_semantics<parallel>], iteration_bounds = array<i64: 1>, scalar_prefetch = 0 : i64, scratch_operands = 0 : i64, tpu.core_type = #tpu.core_type<tc>, window_params = [{transform_indices = @transform_0, window_bounds = array<i64: 8, 32>}, {pipeline_mode = #tpu.pipeline_mode<synchronous>, transform_indices = @transform_1, window_bounds = array<i64: 32, 93>}, {pipeline_mode = #tpu.pipeline_mode<synchronous>, transform_indices = @transform_2, window_bounds = array<i64: 1, 93>}, {pipeline_mode = #tpu.pipeline_mode<synchronous>, transform_indices = @transform_3, window_bounds = array<i64: 93, 90>}, {pipeline_mode = #tpu.pipeline_mode<synchronous>, transform_indices = @transform_4, window_bounds = array<i64: 1, 90>}, {pipeline_mode = #tpu.pipeline_mode<synchronous>, transform_indices = @transform_5, window_bounds = array<i64: 1, 90>}, {pipeline_mode = #tpu.pipeline_mode<synchronous>, transform_indices = @transform_6, window_bounds = array<i64: 1, 1>}, {transform_indices = @transform_7, window_bounds = array<i64: 1, 8>}]} {
    %c0 = arith.constant 0 : index
    %c0_0 = arith.constant 0 : index
    %0 = vector.load %arg1[%c0, %c0_0] : memref<8x32xbf16, #tpu.memory_space<vmem>>, vector<8x32xbf16>
    %c0_1 = arith.constant 0 : index
    %c0_2 = arith.constant 0 : index
    %1 = vector.load %arg2[%c0_1, %c0_2] : memref<32x93xbf16, #tpu.memory_space<vmem>>, vector<32x93xbf16>
    %cst = arith.constant dense<0.000000e+00> : vector<8x93xf32>
    %2 = tpu.matmul %0, %1, %cst {dimension_numbers = #tpu.dot_dimension_numbers<[1], [0], [0], [1], [0, 0, 1, 1], [], []>} : vector<8x32xbf16>, vector<32x93xbf16>, vector<8x93xf32> -> vector<8x93xf32>
    %c0_3 = arith.constant 0 : index
    %c0_4 = arith.constant 0 : index
    %3 = vector.load %arg3[%c0_3, %c0_4] : memref<1x93xf32, #tpu.memory_space<vmem>>, vector<1x93xf32>
    %4 = vector.broadcast %3 : vector<1x93xf32> to vector<8x93xf32>
    %5 = arith.addf %2, %4 : vector<8x93xf32>
    %cst_5 = arith.constant 0.000000e+00 : f32
    %6 = vector.broadcast %cst_5 : f32 to vector<8x93xf32>
    %7 = arith.maximumf %5, %6 : vector<8x93xf32>
    %8 = arith.truncf %7 : vector<8x93xf32> to vector<8x93xbf16>
    %c0_6 = arith.constant 0 : index
    %c0_7 = arith.constant 0 : index
    %9 = vector.load %arg4[%c0_6, %c0_7] : memref<93x90xbf16, #tpu.memory_space<vmem>>, vector<93x90xbf16>
    %cst_8 = arith.constant dense<0.000000e+00> : vector<8x90xf32>
    %10 = tpu.matmul %8, %9, %cst_8 {dimension_numbers = #tpu.dot_dimension_numbers<[1], [0], [0], [1], [0, 0, 1, 1], [], []>} : vector<8x93xbf16>, vector<93x90xbf16>, vector<8x90xf32> -> vector<8x90xf32>
    %c0_9 = arith.constant 0 : index
    %c0_10 = arith.constant 0 : index
    %11 = vector.load %arg5[%c0_9, %c0_10] : memref<1x90xf32, #tpu.memory_space<vmem>>, vector<1x90xf32>
    %12 = vector.broadcast %11 : vector<1x90xf32> to vector<8x90xf32>
    %13 = arith.addf %10, %12 : vector<8x90xf32>
    %cst_11 = arith.constant 0.000000e+00 : f32
    %14 = vector.broadcast %cst_11 : f32 to vector<8x90xf32>
    %15 = arith.maximumf %13, %14 : vector<8x90xf32>
    %c0_12 = arith.constant 0 : index
    %c0_13 = arith.constant 0 : index
    %16 = vector.load %arg6[%c0_12, %c0_13] : memref<1x90xf32, #tpu.memory_space<vmem>>, vector<1x90xf32>
    %17 = vector.broadcast %16 : vector<1x90xf32> to vector<8x90xf32>
    %18 = arith.mulf %15, %17 : vector<8x90xf32>
    %cst_14 = arith.constant dense<0.000000e+00> : vector<8xf32>
    %19 = vector.multi_reduction <add>, %18, %cst_14 [1] : vector<8x90xf32> to vector<8xf32>
    %20 = vector.shape_cast %19 : vector<8xf32> to vector<1x8xf32>
    %c0_15 = arith.constant 0 : index
    %c0_16 = arith.constant 0 : index
    %21 = vector.load %arg7[%c0_15, %c0_16] : memref<1x1xf32, #tpu.memory_space<vmem>>, vector<1x1xf32>
    %22 = vector.broadcast %21 : vector<1x1xf32> to vector<1x8xf32>
    %23 = arith.addf %20, %22 : vector<1x8xf32>
    %c0_17 = arith.constant 0 : index
    %c0_18 = arith.constant 0 : index
    %24 = vector.load %arg8[%c0_17, %c0_18] : memref<1x8xf32, #tpu.memory_space<vmem>>, vector<1x8xf32>
    tpu.vector_store %arg8[%c0_17, %c0_18], %23 {strides = array<i32>} : memref<1x8xf32, #tpu.memory_space<vmem>>, vector<1x8xf32>,
    return
  }
  func.func @transform_0(%arg0: i32) -> (i32, i32) {
    %c0_i32 = arith.constant 0 : i32
    %c0_i32_0 = arith.constant 0 : i32
    return %arg0, %c0_i32 : i32, i32
  }
  func.func @transform_1(%arg0: i32) -> (i32, i32) {
    %c0_i32 = arith.constant 0 : i32
    %c0_i32_0 = arith.constant 0 : i32
    %c0_i32_1 = arith.constant 0 : i32
    return %c0_i32, %c0_i32_0 : i32, i32
  }
  func.func @transform_2(%arg0: i32) -> (i32, i32) {
    %c0_i32 = arith.constant 0 : i32
    %c0_i32_0 = arith.constant 0 : i32
    %c0_i32_1 = arith.constant 0 : i32
    return %c0_i32, %c0_i32_0 : i32, i32
  }
  func.func @transform_3(%arg0: i32) -> (i32, i32) {
    %c0_i32 = arith.constant 0 : i32
    %c0_i32_0 = arith.constant 0 : i32
    %c0_i32_1 = arith.constant 0 : i32
    return %c0_i32, %c0_i32_0 : i32, i32
  }
  func.func @transform_4(%arg0: i32) -> (i32, i32) {
    %c0_i32 = arith.constant 0 : i32
    %c0_i32_0 = arith.constant 0 : i32
    %c0_i32_1 = arith.constant 0 : i32
    return %c0_i32, %c0_i32_0 : i32, i32
  }
  func.func @transform_5(%arg0: i32) -> (i32, i32) {
    %c0_i32 = arith.constant 0 : i32
    %c0_i32_0 = arith.constant 0 : i32
    %c0_i32_1 = arith.constant 0 : i32
    return %c0_i32, %c0_i32_0 : i32, i32
  }
  func.func @transform_6(%arg0: i32) -> (i32, i32) {
    %c0_i32 = arith.constant 0 : i32
    %c0_i32_0 = arith.constant 0 : i32
    %c0_i32_1 = arith.constant 0 : i32
    return %c0_i32, %c0_i32_0 : i32, i32
  }
  func.func @transform_7(%arg0: i32) -> (i32, i32) {
    %c0_i32 = arith.constant 0 : i32
    %c0_i32_0 = arith.constant 0 : i32
    return %c0_i32, %arg0 : i32, i32
  }
}

</mosaic_0001>

<llo_original>
// kernel: regression_forward.1
$region0: #{regression_forward.1}
  #allocation0 [shape = 'u32[]', space=smem, size = 0x4, offset = 0x4, fixed_abs, tag = 'smem constant byte address 0x4 - core index']
  #allocation1 [shape = 'u32[144,128]{1,0:T(1,128)}', space=vmem, size = 0x12000, scoped, tag = 'internal scratch']
  #allocation2 [shape = 'f32[1,1]{1,0:T(1,128)S(1)}', space=vmem, size = 0x200, scoped, tag = 'scoped memory for regression_forward.1']
  %s0 = inlined_call_operand.hbm [shape: bf16[8,32], index: 0, kind: input, shape index: {}]
  %s1 = inlined_call_operand.hbm [shape: bf16[32,93], index: 1, kind: input, shape index: {}]
  %s2 = inlined_call_operand.hbm [shape: f32[1,93], index: 2, kind: input, shape index: {}]
  %s3 = inlined_call_operand.hbm [shape: bf16[93,90], index: 3, kind: input, shape index: {}]
  %s4 = inlined_call_operand.hbm [shape: f32[1,90], index: 4, kind: input, shape index: {}]
  %s5 = inlined_call_operand.hbm [shape: f32[1,90], index: 5, kind: input, shape index: {}]
  %s6 = inlined_call_operand.<no memory space> [shape: f32[1,1], index: 6, kind: input, shape index: {}]
  %s7 = inlined_call_operand.hbm [shape: f32[1,8], index: 7, kind: output, shape index: {}]
  %s8 = sld [smem:[#allocation0]]
  $region62: #{regression_forward.1} parent=0
    _
  %s10 = ssub.s32 1, %s8
  %s11 = scalar_select 0, %s10, %s8
  %v12 = vstv %s6
  %13 = vst [vmem:[#allocation2] sm:$0x1] %v12
  $region1: #{regression_forward.1} parent=0
    #allocation3 [shape = 'u8[2048]{0}', space=vmem, size = 0x800, scoped, tag = 'input window, operand 0, single buffered']
    #allocation4 [shape = 's32[1]{0}', space=sflag, size = 0x4, scoped, tag = 'scoped memory for regression_forward.1']
    #allocation5 [shape = 's32[1]{0}', space=sflag, size = 0x4, scoped, tag = 'scoped memory for regression_forward.1']
    #allocation6 [shape = 'u8[8192]{0}', space=vmem, size = 0x2000, scoped, tag = 'input window, operand 1, single buffered']
    #allocation7 [shape = 's32[1]{0}', space=sflag, size = 0x4, scoped, tag = 'scoped memory for regression_forward.1']
    #allocation8 [shape = 'u8[512]{0}', space=vmem, size = 0x400, scoped, tag = 'input window, operand 2, single buffered']
    #allocation9 [shape = 'u8[24576]{0}', space=vmem, size = 0x6000, scoped, tag = 'input window, operand 3, single buffered']
    #allocation10 [shape = 's32[1]{0}', space=sflag, size = 0x4, scoped, tag = 'scoped memory for regression_forward.1']
    #allocation11 [shape = 'u8[512]{0}', space=vmem, size = 0x400, scoped, tag = 'input window, operand 4, single buffered']
    #allocation12 [shape = 'u8[512]{0}', space=vmem, size = 0x400, scoped, tag = 'input window, operand 5, single buffered']
    #allocation13 [shape = 's32[1]{0}', space=sflag, size = 0x4, scoped, tag = 'scoped memory for regression_forward.1']
    #allocation14 [shape = 'u8[512]{0}', space=vmem, size = 0x400, scoped, tag = 'output window, operand 0, single buffered']
    %14 = vsyncpa [#allocation4], 0
    %15 = vsyncpa [#allocation7], 0
    %16 = vsyncpa [#allocation10], 0
    %17 = vsyncpa [#allocation13], 0
    %18 = vsyncpa [#allocation5], 0
    // Predicated region
    $region2: #{regression_forward.1} parent=1 // pred_check
      _
    $region3: #{regression_forward.1} parent=1 // pred_check_branch
      %20 = sbr.rel (0) target = $region5
    $region4: #{regression_forward.1} parent=1 // pred_region
      %s22 = ssub.s32 64, 64
      %23 = vsyncadd [#allocation4], %s22
      %s25 = sshll.u32 [#allocation3], 4
      %s26 = int_to_ptr.vmem [resolvable:$true] %s25
      %28 = dma.hbm_to_vmem [thread:$0]  %s0, 64, %s26, [#allocation4]
    $region5: #{regression_forward.1} parent=1 // pred_fallthru
      _
    // Predicated region
    $region6: #{regression_forward.1} parent=1 // pred_check
      _
    $region7: #{regression_forward.1} parent=1 // pred_check_branch
      %30 = sbr.rel (0) target = $region9
    $region8: #{regression_forward.1} parent=1 // pred_region
      %s32 = ssub.s32 256, 256
      %33 = vsyncadd [#allocation7], %s32
      %s34 = sshll.u32 [#allocation6], 4
      %s35 = int_to_ptr.vmem [resolvable:$true] %s34
      %40 = dma.hbm_to_vmem [thread:$0]  %s1, 256, %s35, [#allocation7], 64, 64, 4
    $region9: #{regression_forward.1} parent=1 // pred_fallthru
      _
    // Predicated region
    $region10: #{regression_forward.1} parent=1 // pred_check
      _
    $region11: #{regression_forward.1} parent=1 // pred_check_branch
      %42 = sbr.rel (0) target = $region13
    $region12: #{regression_forward.1} parent=1 // pred_region
      %s44 = ssub.s32 16, 16
      %45 = vsyncadd [#allocation7], %s44
      %s47 = sshll.u32 [#allocation8], 4
      %s48 = int_to_ptr.vmem [resolvable:$true] %s47
      %50 = dma.hbm_to_vmem [thread:$0]  %s2, 16, %s48, [#allocation7]
    $region13: #{regression_forward.1} parent=1 // pred_fallthru
      _
    // Predicated region
    $region14: #{regression_forward.1} parent=1 // pred_check
      _
    $region15: #{regression_forward.1} parent=1 // pred_check_branch
      %52 = sbr.rel (0) target = $region17
    $region16: #{regression_forward.1} parent=1 // pred_region
      %s54 = ssub.s32 768, 768
      %55 = vsyncadd [#allocation10], %s54
      %s56 = sshll.u32 [#allocation9], 4
      %s57 = int_to_ptr.vmem [resolvable:$true] %s56
      %62 = dma.hbm_to_vmem [thread:$0]  %s3, 768, %s57, [#allocation10], 64, 64, 4
    $region17: #{regression_forward.1} parent=1 // pred_fallthru
      _
    // Predicated region
    $region18: #{regression_forward.1} parent=1 // pred_check
      _
    $region19: #{regression_forward.1} parent=1 // pred_check_branch
      %64 = sbr.rel (0) target = $region21
    $region20: #{regression_forward.1} parent=1 // pred_region
      %s66 = ssub.s32 16, 16
      %67 = vsyncadd [#allocation10], %s66
      %s69 = sshll.u32 [#allocation11], 4
      %s70 = int_to_ptr.vmem [resolvable:$true] %s69
      %72 = dma.hbm_to_vmem [thread:$0]  %s4, 16, %s70, [#allocation10]
    $region21: #{regression_forward.1} parent=1 // pred_fallthru
      _
    // Predicated region
    $region22: #{regression_forward.1} parent=1 // pred_check
      _
    $region23: #{regression_forward.1} parent=1 // pred_check_branch
      %74 = sbr.rel (0) target = $region25
    $region24: #{regression_forward.1} parent=1 // pred_region
      %s76 = ssub.s32 16, 16
      %77 = vsyncadd [#allocation13], %s76
      %s79 = sshll.u32 [#allocation12], 4
      %s80 = int_to_ptr.vmem [resolvable:$true] %s79
      %82 = dma.hbm_to_vmem [thread:$0]  %s5, 16, %s80, [#allocation13]
    $region25: #{regression_forward.1} parent=1 // pred_fallthru
      _
    // Predicated region
    $region26: #{regression_forward.1} parent=1 // pred_check
      _
    $region27: #{regression_forward.1} parent=1 // pred_check_branch
      %84 = sbr.rel (0) target = $region29
    $region28: #{regression_forward.1} parent=1 // pred_region
      _
    $region29: #{regression_forward.1} parent=1 // pred_fallthru
      _
    // Predicated region
    $region30: #{regression_forward.1} parent=1 // pred_check
      _
    $region31: #{regression_forward.1} parent=1 // pred_check_branch
      %86 = sbr.rel (0) target = $region33
    $region32: #{regression_forward.1} parent=1 // pred_region
      %87 = dma.done [#allocation4], 64
    $region33: #{regression_forward.1} parent=1 // pred_fallthru
      _
    // Predicated region
    $region34: #{regression_forward.1} parent=1 // pred_check
      _
    $region35: #{regression_forward.1} parent=1 // pred_check_branch
      %89 = sbr.rel (0) target = $region37
    $region36: #{regression_forward.1} parent=1 // pred_region
      %90 = dma.done [#allocation7], 256
    $region37: #{regression_forward.1} parent=1 // pred_fallthru
      _
    // Predicated region
    $region38: #{regression_forward.1} parent=1 // pred_check
      _
    $region39: #{regression_forward.1} parent=1 // pred_check_branch
      %92 = sbr.rel (0) target = $region41
    $region40: #{regression_forward.1} parent=1 // pred_region
      %93 = dma.done [#allocation7], 16
    $region41: #{regression_forward.1} parent=1 // pred_fallthru
      _
    // Predicated region
    $region42: #{regression_forward.1} parent=1 // pred_check
      _
    $region43: #{regression_forward.1} parent=1 // pred_check_branch
      %95 = sbr.rel (0) target = $region45
    $region44: #{regression_forward.1} parent=1 // pred_region
      %96 = dma.done [#allocation10], 768
    $region45: #{regression_forward.1} parent=1 // pred_fallthru
      _
    // Predicated region
    $region46: #{regression_forward.1} parent=1 // pred_check
      _
    $region47: #{regression_forward.1} parent=1 // pred_check_branch
      %98 = sbr.rel (0) target = $region49
    $region48: #{regression_forward.1} parent=1 // pred_region
      %99 = dma.done [#allocation10], 16
    $region49: #{regression_forward.1} parent=1 // pred_fallthru
      _
    // Predicated region
    $region50: #{regression_forward.1} parent=1 // pred_check
      _
    $region51: #{regression_forward.1} parent=1 // pred_check_branch
      %101 = sbr.rel (0) target = $region53
    $region52: #{regression_forward.1} parent=1 // pred_region
      %102 = dma.done [#allocation13], 16
    $region53: #{regression_forward.1} parent=1 // pred_fallthru
      _
    %v104 = vld [vmem:[#allocation3] sm:$0xf]
    %v105 = vld [vmem:[#allocation6] sm:$0xf]
    %v106 = vld [vmem:[#allocation6 + $0x4] sm:$0xf]
    %v107 = vld [vmem:[#allocation6 + $0x8] sm:$0xf]
    %v108 = vld [vmem:[#allocation6 + $0xc] sm:$0xf]
    %v109 = vld [vmem:[#allocation8] sm:$0x1]
    %v111 = vlaneseq
    %v112 = vshrl.u32 %v111, 7
    %v113 = vsub.s32 0, %v112
    %v114 = vrot.slane %v109, %v113
    %v120 = vunpack.c.l.b16 %v105
    %v121 = vunpack.c.l.b16 %v106
    %v122 = vunpack.c.l.b16 %v107
    %v123 = vunpack.c.l.b16 %v108
    %v124 = vpack.c.b16 %v121, %v120
    %v125 = vpack.c.b16 %v123, %v122
    %vm128 = vcmask 261120
    %v130 = vsel %vm128, %v104, 0
    %132 = vmatprep.subr.bf16.mxu0 0
    %133 = vmatpush1.bf16.msra.mxu0 %v124
    %134 = vmatprep.subr.bf16.mxu0 0
    %135 = vmatpush1.bf16.msra.mxu0 %v125
    %136 = vmatprep.subr.bf16.mxu0 0
    %137 = vmatpush1.bf16.msra.mxu0 0
    %138 = vmatprep.subr.bf16.mxu0 0
    %139 = vmatpush1.bf16.msra.mxu0 0
    %140 = vmatprep.subr.bf16.mxu0 0
    %141 = vmatpush1.bf16.msra.mxu0 0
    %142 = vmatprep.subr.bf16.mxu0 0
    %143 = vmatpush1.bf16.msra.mxu0 0
    %144 = vmatprep.subr.bf16.mxu0 0
    %145 = vmatpush1.bf16.msra.mxu0 0
    %146 = vmatprep.subr.bf16.mxu0 0
    %147 = vmatpush1.bf16.msra.mxu0 0
    %148 = vmatprep.subr.bf16.mxu0 0
    %149 = vmatpush1.bf16.msra.mxu0 0
    %150 = vmatprep.subr.bf16.mxu0 0
    %151 = vmatpush1.bf16.msra.mxu0 0
    %152 = vmatprep.subr.bf16.mxu0 0
    %153 = vmatpush1.bf16.msra.mxu0 0
    %154 = vmatprep.subr.bf16.mxu0 0
    %155 = vmatpush1.bf16.msra.mxu0 0
    %156 = vmatprep.subr.bf16.mxu0 0
    %157 = vmatpush1.bf16.msra.mxu0 0
    %158 = vmatprep.subr.bf16.mxu0 0
    %159 = vmatpush1.bf16.msra.mxu0 0
    %160 = vmatprep.subr.bf16.mxu0 0
    %161 = vmatpush1.bf16.msra.mxu0 0
    %162 = vmatprep.subr.bf16.mxu0 0
    %163 = vmatpush1.bf16.msra.mxu0 0
    %164 = vmatprep.mubr.bf16.mxu0 0
    %165 = vmatmul.mubr.bf16.gmra.mrb[0].mxu0 %v130
    %v166 = vpop.f32.mrb[0].mxu0
    %v167 = vadd.f32 %v114, %v166
    %v168 = vpop.f32.mrb[0].mxu0
    %v169 = vpop.f32.mrb[0].mxu0
    %v170 = vpop.f32.mrb[0].mxu0
    %171 = vdwg.mxu0
    %v172 = vmax.f32 %v167, 0.0
    %v173 = vpack.c.bf16 %v172, %v172
    %v174 = vld [vmem:[#allocation9] sm:$0xf]
    %v175 = vld [vmem:[#allocation9 + $0x4] sm:$0xf]
    %v176 = vld [vmem:[#allocation9 + $0x8] sm:$0xf]
    %v177 = vld [vmem:[#allocation9 + $0xc] sm:$0xf]
    %v178 = vld [vmem:[#allocation9 + $0x10] sm:$0xf]
    %v179 = vld [vmem:[#allocation9 + $0x14] sm:$0xf]
    %v180 = vld [vmem:[#allocation9 + $0x18] sm:$0xf]
    %v181 = vld [vmem:[#allocation9 + $0x1c] sm:$0xf]
    %v182 = vld [vmem:[#allocation9 + $0x20] sm:$0xf]
    %v183 = vld [vmem:[#allocation9 + $0x24] sm:$0xf]
    %v184 = vld [vmem:[#allocation9 + $0x28] sm:$0xf]
    %v185 = vld [vmem:[#allocation9 + $0x2c] sm:$0x7]
    %v186 = vld [vmem:[#allocation11] sm:$0x1]
    %v188 = vlaneseq
    %v189 = vshrl.u32 %v188, 7
    %v190 = vsub.s32 0, %v189
    %v191 = vrot.slane %v186, %v190
    %v205 = vunpack.c.l.b16 %v174
    %v206 = vunpack.c.l.b16 %v175
    %v207 = vunpack.c.l.b16 %v176
    %v208 = vunpack.c.l.b16 %v177
    %v209 = vunpack.c.l.b16 %v178
    %v210 = vunpack.c.l.b16 %v179
    %v211 = vunpack.c.l.b16 %v180
    %v212 = vunpack.c.l.b16 %v181
    %v213 = vunpack.c.l.b16 %v182
    %v214 = vunpack.c.l.b16 %v183
    %v215 = vunpack.c.l.b16 %v184
    %v216 = vunpack.c.l.b16 %v185
    %v217 = vpack.c.b16 %v206, %v205
    %v218 = vpack.c.b16 %v208, %v207
    %v219 = vpack.c.b16 %v210, %v209
    %v220 = vpack.c.b16 %v212, %v211
    %v221 = vpack.c.b16 %v214, %v213
    %v222 = vpack.c.b16 %v216, %v215
    %vm228 = vcmask 760832
    %v230 = vsel %vm228, %v173, 0
    %vm232 = vcmask 1045504
    %vm233 = vcmask 1046528
    %v234 = vsel %vm232, 4294967295, 65535
    %v235 = vsel %vm233, %v234, 0
    %v237 = vand.u32 %v222, %v235
    %239 = vmatprep.subr.bf16.mxu0 0
    %240 = vmatpush1.bf16.msra.mxu0 %v217
    %241 = vmatprep.subr.bf16.mxu0 0
    %242 = vmatpush1.bf16.msra.mxu0 %v218
    %243 = vmatprep.subr.bf16.mxu0 0
    %244 = vmatpush1.bf16.msra.mxu0 %v219
    %245 = vmatprep.subr.bf16.mxu0 0
    %246 = vmatpush1.bf16.msra.mxu0 %v220
    %247 = vmatprep.subr.bf16.mxu0 0
    %248 = vmatpush1.bf16.msra.mxu0 %v221
    %249 = vmatprep.subr.bf16.mxu0 0
    %250 = vmatpush1.bf16.msra.mxu0 %v237
    %251 = vmatprep.subr.bf16.mxu0 0
    %252 = vmatpush1.bf16.msra.mxu0 0
    %253 = vmatprep.subr.bf16.mxu0 0
    %254 = vmatpush1.bf16.msra.mxu0 0
    %255 = vmatprep.subr.bf16.mxu0 0
    %256 = vmatpush1.bf16.msra.mxu0 0
    %257 = vmatprep.subr.bf16.mxu0 0
    %258 = vmatpush1.bf16.msra.mxu0 0
    %259 = vmatprep.subr.bf16.mxu0 0
    %260 = vmatpush1.bf16.msra.mxu0 0
    %261 = vmatprep.subr.bf16.mxu0 0
    %262 = vmatpush1.bf16.msra.mxu0 0
    %263 = vmatprep.subr.bf16.mxu0 0
    %264 = vmatpush1.bf16.msra.mxu0 0
    %265 = vmatprep.subr.bf16.mxu0 0
    %266 = vmatpush1.bf16.msra.mxu0 0
    %267 = vmatprep.subr.bf16.mxu0 0
    %268 = vmatpush1.bf16.msra.mxu0 0
    %269 = vmatprep.subr.bf16.mxu0 0
    %270 = vmatpush1.bf16.msra.mxu0 0
    %271 = vmatprep.mubr.bf16.mxu0 0
    %272 = vmatmul.mubr.bf16.gmra.mrb[0].mxu0 %v230
    %v273 = vpop.f32.mrb[0].mxu0
    %v274 = vadd.f32 %v191, %v273
    %v275 = vpop.f32.mrb[0].mxu0
    %v276 = vpop.f32.mrb[0].mxu0
    %v277 = vpop.f32.mrb[0].mxu0
    %278 = vdwg.mxu0
    %v279 = vmax.f32 %v274, 0.0
    %v280 = vld [vmem:[#allocation12] sm:$0x1]
    %v282 = vlaneseq
    %v283 = vshrl.u32 %v282, 7
    %v284 = vsub.s32 0, %v283
    %v285 = vrot.slane %v280, %v284
    %v287 = vmul.f32 %v279, %v285
    %vm288 = vcmask 736256
    %v289 = vsel %vm288, %v287, 0.0
    %290 = vadd.xlane.f32.xlu0 %v289
    %v291 = vpop.xlane.xlu0 %290
    %v292 = vld [vmem:[#allocation2] sm:$0x1]
    %294 = vset.pattern.permute.xlu0 0
    %295 = vperm.xlu0 %294, %v292
    %v296 = vpop.permute.xlu0 %295
    %v298 = vlaneseq
    %v299 = vshrl.u32 %v298, 7
    %v300 = vsub.s32 0, %v299
    %v301 = vrot.slane %v296, %v300
    %v302 = vadd.f32 %v291, %v301
    %v304 = vlaneseq
    %v305 = vand.u32 %v304, 127
    %v306 = vlaneseq
    %v307 = vshrl.u32 %v306, 7
    %v308 = vsub.s32 %v305, %v307
    %v309 = vrot.slane %v302, %v308
    %vm311 = vcmask 57344
    %312 = vst.msk [vmem:[#allocation14] sm:$0x1] %vm311, %v309
    // Predicated region
    $region54: #{regression_forward.1} parent=1 // pred_check
      _
    $region55: #{regression_forward.1} parent=1 // pred_check_branch
      %314 = sbr.rel (0) target = $region57
    $region56: #{regression_forward.1} parent=1 // pred_region
      %s316 = ssub.s32 16, 16
      %317 = vsyncadd [#allocation5], %s316
      %s319 = sshll.u32 [#allocation14], 4
      %s320 = int_to_ptr.vmem [resolvable:$true] %s319
      %322 = dma.vmem_to_hbm [thread:$0]  %s320, 16, %s7, [#allocation5]
    $region57: #{regression_forward.1} parent=1 // pred_fallthru
      _
    // Predicated region
    $region58: #{regression_forward.1} parent=1 // pred_check
      _
    $region59: #{regression_forward.1} parent=1 // pred_check_branch
      %324 = sbr.rel (0) target = $region61
    $region60: #{regression_forward.1} parent=1 // pred_region
      %325 = dma.done [#allocation5], 16
    $region61: #{regression_forward.1} parent=1 // pred_fallthru
      _
    %326 = vsyncpa [#allocation4], 1
    %327 = vsyncpa [#allocation7], 1
    %328 = vsyncpa [#allocation10], 1
    %329 = vsyncpa [#allocation13], 1
    %330 = vsyncpa [#allocation5], 1

</llo_original>
